<compile_context>
chip_gen: v5e
topology: v5e:2x2
jax: 0.10.0
libtpu: 0.0.40
codegen_flags: <defaults>
</compile_context>

<pallas_src>
import jax
import jax.numpy as jnp
from jax.experimental import pallas as pl
from jax.experimental.pallas import tpu as pltpu


def _round_up(n, m):
    return -(-n // m) * m


def _mlp_kernel(x_ref, w1_ref, b1_ref, w23_ref, b23_ref, o_ref):
    # fc1 (MXU, fp32 accumulate) + bias + ReLU epilogue in fp32 (v5e-safe VPU path)
    h1 = jnp.dot(x_ref[...], w1_ref[...], preferred_element_type=jnp.float32)
    h1 = jnp.maximum(h1 + b1_ref[...], 0.0)
    # fused fc2·fc3: one matmul against W23 = W2 @ W3, bias b23 = b2 @ W3 + b3
    out = jnp.dot(h1.astype(w23_ref.dtype), w23_ref[...],
                  preferred_element_type=jnp.float32) + b23_ref[...]
    o_ref[...] = out.astype(o_ref.dtype)


def fuse_params(params, compute_dtype=jnp.float32):
    """Fold fc2 into fc3 (exact math: no activation between them)."""
    w1, b1, w2, b2, w3, b3 = params
    w2f = w2.astype(jnp.float32)
    w3f = w3.astype(jnp.float32)
    w23 = w2f @ w3f                                   # [30, out]
    b23 = b2.astype(jnp.float32) @ w3f + b3.astype(jnp.float32)  # [1, out]
    return (w1.astype(compute_dtype), b1.astype(jnp.float32),
            w23.astype(compute_dtype), b23.astype(jnp.float32))


def _vmem_limit_bytes(tb, in_dim, hid, out_dim, act_bytes):
    lane = lambda n: _round_up(n, 128)
    sub = lambda n: _round_up(n, 8)
    x_tile = sub(tb) * lane(in_dim) * act_bytes * 2       # double-buffered input tile
    o_tile = sub(tb) * lane(out_dim) * 4 * 2              # double-buffered output tile (f32)
    h1 = sub(tb) * lane(hid) * 4                          # fp32 intermediate
    w = sub(in_dim) * lane(hid) * act_bytes + sub(hid) * lane(out_dim) * act_bytes
    b = sub(1) * lane(hid) * 4 + sub(1) * lane(out_dim) * 4
    total = x_tile + o_tile + h1 + 2 * (w + b)
    return min(max(total + (2 << 20), 8 << 20), 100 << 20)


def network_forward(x, params, *, block_b=512, compute_dtype=jnp.float32):
    """Forward pass of the DQN Network. x: [B, input_params] float32.

    block_b: batch tile size (rounded to a multiple of 8); weights stay
    VMEM-resident across batch tiles.
    compute_dtype: jnp.float32 or jnp.bfloat16 (MXU inputs); accumulation and
    the bias/ReLU epilogue are always fp32.
    """
    w1, b1, w23, b23 = fuse_params(params, compute_dtype)
    B, in_dim = x.shape
    hid = w1.shape[1]
    out_dim = w23.shape[1]

    # Batch tile: 8-sublane aligned; pad B up to a multiple of the tile.
    tb = _round_up(min(block_b, _round_up(B, 8)), 8)
    b_pad = _round_up(B, tb)
    if b_pad != B:
        x = jnp.pad(x, ((0, b_pad - B), (0, 0)))
    x = x.astype(compute_dtype)

    act_bytes = jnp.dtype(compute_dtype).itemsize
    cost = pl.CostEstimate(
        flops=2 * b_pad * (in_dim * hid + hid * out_dim),
        transcendentals=0,
        bytes_accessed=(b_pad * in_dim * act_bytes
                        + (in_dim * hid + hid * out_dim) * act_bytes
                        + (hid + out_dim) * 4
                        + b_pad * out_dim * 4),
    )

    out = pl.pallas_call(
        _mlp_kernel,
        out_shape=jax.ShapeDtypeStruct((b_pad, out_dim), jnp.float32),
        grid_spec=pltpu.PrefetchScalarGridSpec(
            num_scalar_prefetch=0,
            grid=(b_pad // tb,),
            in_specs=[
                pl.BlockSpec((tb, in_dim), lambda i: (i, 0)),    # x: tiled over batch
                pl.BlockSpec((in_dim, hid), lambda i: (0, 0)),   # W1: VMEM-resident
                pl.BlockSpec((1, hid), lambda i: (0, 0)),        # b1
                pl.BlockSpec((hid, out_dim), lambda i: (0, 0)),  # W23 (fused)
                pl.BlockSpec((1, out_dim), lambda i: (0, 0)),    # b23 (fused)
            ],
            out_specs=pl.BlockSpec((tb, out_dim), lambda i: (i, 0)),
        ),
        compiler_params=pltpu.CompilerParams(
            dimension_semantics=("parallel",),  # shard batch tiles across TensorCores
            vmem_limit_bytes=_vmem_limit_bytes(tb, in_dim, hid, out_dim, act_bytes),
        ),
        cost_estimate=cost,
    )(x, w1, b1, w23, b23)
    return out[:B]


def init_params(key, input_params, output_params):
    """Deterministic init mirroring Network.init_weights_bias:
    weights ~ N(0, 0.2), biases = 0. Weights stored as [in, out]."""
    k1, k2, k3 = jax.random.split(key, 3)
    w1 = 0.2 * jax.random.normal(k1, (input_params, 30), dtype=jnp.float32)
    b1 = jnp.zeros((1, 30), dtype=jnp.float32)
    w2 = 0.2 * jax.random.normal(k2, (30, 15), dtype=jnp.float32)
    b2 = jnp.zeros((1, 15), dtype=jnp.float32)
    w3 = 0.2 * jax.random.normal(k3, (15, output_params), dtype=jnp.float32)
    b3 = jnp.zeros((1, output_params), dtype=jnp.float32)
    return (w1, b1, w2, b2, w3, b3)


if __name__ == "__main__":
    key = jax.random.PRNGKey(0)
    k_params, k_x = jax.random.split(key)

    batch = 64
    input_params = 16
    output_params = 4

    params = init_params(k_params, input_params, output_params)
    x = jax.random.normal(k_x, (batch, input_params), dtype=jnp.float32)

    # Reference (same math as the PyTorch forward), unfused, plain JAX.
    w1, b1, w2, b2, w3, b3 = params
    ref = jnp.maximum(x @ w1 + b1, 0.0)
    ref = ref @ w2 + b2
    ref = ref @ w3 + b3

    # fp32 path, gridded over batch (TB=32 -> grid=(2,)) to exercise tiling.
    out = jax.block_until_ready(
        network_forward(x, params, block_b=32, compute_dtype=jnp.float32))
    assert out.shape == (batch, output_params)
    assert jnp.allclose(out, ref, atol=1e-4, rtol=1e-4), \
        float(jnp.max(jnp.abs(out - ref)))

    # bf16 weights/activations (v6e/v7x MXU-native), fp32 accumulate + epilogue.
    out_bf16 = jax.block_until_ready(
        network_forward(x, params, block_b=32, compute_dtype=jnp.bfloat16))
    assert out_bf16.shape == (batch, output_params)
    assert jnp.allclose(out_bf16, ref, atol=1e-1, rtol=1e-1), \
        float(jnp.max(jnp.abs(out_bf16 - ref)))

    print("KERNEL_OK")
</pallas_src>

<mosaic_0001>
module attributes {stable_mosaic.version = 11 : i64} {
  func.func @_mlp_kernel(%arg0: i32, %arg1: memref<32x16xf32, #tpu.memory_space<vmem>>, %arg2: memref<16x30xf32, #tpu.memory_space<vmem>>, %arg3: memref<1x30xf32, #tpu.memory_space<vmem>>, %arg4: memref<30x4xf32, #tpu.memory_space<vmem>>, %arg5: memref<1x4xf32, #tpu.memory_space<vmem>>, %arg6: memref<32x4xf32, #tpu.memory_space<vmem>>) attributes {dimension_semantics = [#tpu.dimension_semantics<parallel>], iteration_bounds = array<i64: 2>, scalar_prefetch = 0 : i64, scratch_operands = 0 : i64, tpu.core_type = #tpu.core_type<tc>, window_params = [{transform_indices = @transform_0, window_bounds = array<i64: 32, 16>}, {pipeline_mode = #tpu.pipeline_mode<synchronous>, transform_indices = @transform_1, window_bounds = array<i64: 16, 30>}, {pipeline_mode = #tpu.pipeline_mode<synchronous>, transform_indices = @transform_2, window_bounds = array<i64: 1, 30>}, {pipeline_mode = #tpu.pipeline_mode<synchronous>, transform_indices = @transform_3, window_bounds = array<i64: 30, 4>}, {pipeline_mode = #tpu.pipeline_mode<synchronous>, transform_indices = @transform_4, window_bounds = array<i64: 1, 4>}, {transform_indices = @transform_5, window_bounds = array<i64: 32, 4>}]} {
    %c0 = arith.constant 0 : index
    %c0_0 = arith.constant 0 : index
    %0 = vector.load %arg1[%c0, %c0_0] : memref<32x16xf32, #tpu.memory_space<vmem>>, vector<32x16xf32>
    %c0_1 = arith.constant 0 : index
    %c0_2 = arith.constant 0 : index
    %1 = vector.load %arg2[%c0_1, %c0_2] : memref<16x30xf32, #tpu.memory_space<vmem>>, vector<16x30xf32>
    %cst = arith.constant dense<0.000000e+00> : vector<32x30xf32>
    %2 = tpu.matmul %0, %1, %cst {dimension_numbers = #tpu.dot_dimension_numbers<[1], [0], [0], [1], [0, 0, 1, 1], [], []>} : vector<32x16xf32>, vector<16x30xf32>, vector<32x30xf32> -> vector<32x30xf32>
    %c0_3 = arith.constant 0 : index
    %c0_4 = arith.constant 0 : index
    %3 = vector.load %arg3[%c0_3, %c0_4] : memref<1x30xf32, #tpu.memory_space<vmem>>, vector<1x30xf32>
    %4 = vector.broadcast %3 : vector<1x30xf32> to vector<32x30xf32>
    %5 = arith.addf %2, %4 : vector<32x30xf32>
    %cst_5 = arith.constant 0.000000e+00 : f32
    %6 = vector.broadcast %cst_5 : f32 to vector<32x30xf32>
    %7 = arith.maximumf %5, %6 : vector<32x30xf32>
    %c0_6 = arith.constant 0 : index
    %c0_7 = arith.constant 0 : index
    %8 = vector.load %arg4[%c0_6, %c0_7] : memref<30x4xf32, #tpu.memory_space<vmem>>, vector<30x4xf32>
    %cst_8 = arith.constant dense<0.000000e+00> : vector<32x4xf32>
    %9 = tpu.matmul %7, %8, %cst_8 {dimension_numbers = #tpu.dot_dimension_numbers<[1], [0], [0], [1], [0, 0, 1, 1], [], []>} : vector<32x30xf32>, vector<30x4xf32>, vector<32x4xf32> -> vector<32x4xf32>
    %c0_9 = arith.constant 0 : index
    %c0_10 = arith.constant 0 : index
    %10 = vector.load %arg5[%c0_9, %c0_10] : memref<1x4xf32, #tpu.memory_space<vmem>>, vector<1x4xf32>
    %11 = vector.broadcast %10 : vector<1x4xf32> to vector<32x4xf32>
    %12 = arith.addf %9, %11 : vector<32x4xf32>
    %c0_11 = arith.constant 0 : index
    %c0_12 = arith.constant 0 : index
    %13 = vector.load %arg6[%c0_11, %c0_12] : memref<32x4xf32, #tpu.memory_space<vmem>>, vector<32x4xf32>
    tpu.vector_store %arg6[%c0_11, %c0_12], %12 {strides = array<i32>} : memref<32x4xf32, #tpu.memory_space<vmem>>, vector<32x4xf32>,
    return
  }
  func.func @transform_0(%arg0: i32) -> (i32, i32) {
    %c0_i32 = arith.constant 0 : i32
    %c0_i32_0 = arith.constant 0 : i32
    return %arg0, %c0_i32 : i32, i32
  }
  func.func @transform_1(%arg0: i32) -> (i32, i32) {
    %c0_i32 = arith.constant 0 : i32
    %c0_i32_0 = arith.constant 0 : i32
    %c0_i32_1 = arith.constant 0 : i32
    return %c0_i32, %c0_i32_0 : i32, i32
  }
  func.func @transform_2(%arg0: i32) -> (i32, i32) {
    %c0_i32 = arith.constant 0 : i32
    %c0_i32_0 = arith.constant 0 : i32
    %c0_i32_1 = arith.constant 0 : i32
    return %c0_i32, %c0_i32_0 : i32, i32
  }
  func.func @transform_3(%arg0: i32) -> (i32, i32) {
    %c0_i32 = arith.constant 0 : i32
    %c0_i32_0 = arith.constant 0 : i32
    %c0_i32_1 = arith.constant 0 : i32
    return %c0_i32, %c0_i32_0 : i32, i32
  }
  func.func @transform_4(%arg0: i32) -> (i32, i32) {
    %c0_i32 = arith.constant 0 : i32
    %c0_i32_0 = arith.constant 0 : i32
    %c0_i32_1 = arith.constant 0 : i32
    return %c0_i32, %c0_i32_0 : i32, i32
  }
  func.func @transform_5(%arg0: i32) -> (i32, i32) {
    %c0_i32 = arith.constant 0 : i32
    %c0_i32_0 = arith.constant 0 : i32
    return %arg0, %c0_i32 : i32, i32
  }
}

</mosaic_0001>

<llo_original>
// kernel: tpu_custom_call.1
$region0: #{tpu_custom_call.1}
  #allocation0 [shape = 'u32[]', space=smem, size = 0x4, offset = 0x4, fixed_abs, tag = 'smem constant byte address 0x4 - core index']
  #allocation1 [shape = 'u32[72,128]{1,0:T(1,128)}', space=vmem, size = 0x9000, scoped, tag = 'internal scratch']
  %s0 = inlined_call_operand.vmem [shape: f32[64,16], index: 0, kind: input, shape index: {}]
  %s1 = inlined_call_operand.vmem [shape: f32[16,30], index: 1, kind: input, shape index: {}]
  %s2 = inlined_call_operand.vmem [shape: f32[1,30], index: 2, kind: input, shape index: {}]
  %s3 = inlined_call_operand.vmem [shape: f32[30,4], index: 3, kind: input, shape index: {}]
  %s4 = inlined_call_operand.vmem [shape: f32[1,4], index: 4, kind: input, shape index: {}]
  %s5 = inlined_call_operand.vmem [shape: f32[64,4], index: 5, kind: output, shape index: {}]
  %s6 = sld [smem:[#allocation0]]
  $region53: #{tpu_custom_call.1} parent=0
    _
  %s8 = ssub.s32 1, %s6
  %s9 = scalar_select 0, %s8, %s6
  loop: start=0, step=1, limit=4
  $region2: #{tpu_custom_call.1} parent=0 // loop_pre_header
    _
  $region3: #{tpu_custom_call.1} parent=0 // loop_header
    %s11 = sphi 0, %s15
    %p12 = scmp.ge.s32.totalorder %s11, 4
    %s21 = sphi 0, %s23
    %s24 = sphi 0, %s21
    %s25 = sphi 0, %s24
    %s41 = sphi 0, %s25
    %s45 = sphi 0, %s45
    %s47 = sphi 0, %s45
    %s48 = sphi 0, %s47
    %s62 = sphi 0, %s48
    %s66 = sphi 0, %s66
    %s68 = sphi 0, %s66
    %s69 = sphi 0, %s68
    %s83 = sphi 0, %s69
    %s87 = sphi 0, %s87
    %s89 = sphi 0, %s87
    %s90 = sphi 0, %s89
    %s104 = sphi 0, %s90
    %s108 = sphi 0, %s108
    %s110 = sphi 0, %s108
    %s111 = sphi 0, %s110
    %s125 = sphi 0, %s111
    %s131 = sphi 0, %s133
    %s134 = sphi 0, %s131
    %s135 = sphi 0, %s134
    %s151 = sphi 0, %s135
  $region4: #{tpu_custom_call.1} parent=0 // loop_header_branch
    %14 = sbr.rel (%p12) target = $region8
  $region5: #{tpu_custom_call.1} parent=0 // loop_body
    %s16 = ssub.s32 %s11, 1
    %s17 = ssub.s32 %s11, 2
    %s18 = sadd.s32 %s11, 1
    %s19 = ssub.s32 %s11, %s18
    %p20 = scmp.eq.s32.totalorder %s19, 0
    %s22 = sadd.s32 %s21, 1
    %s23 = scalar_select %p20, %s21, %s22
    %p26 = pneg %p20
    %p27 = scmp.eq.s32.totalorder %s11, 1
    %p28 = por %p26, %p27
    %p29 = scmp.ne.s32.totalorder %s21, %s24
    %p30 = scmp.eq.s32.totalorder %s11, 0
    %p31 = por %p29, %p30
    %p32 = scmp.ne.s32.totalorder %s21, %s24
    %p33 = scmp.eq.s32.totalorder %s16, 1
    %p34 = por %p32, %p33
    %p35 = scmp.ne.s32.totalorder %s24, %s25
    %p36 = scmp.eq.s32.totalorder %s16, 0
    %p37 = por %p35, %p36
    %p38 = scmp.ne.s32.totalorder %s24, %s25
    %p39 = scmp.eq.s32.totalorder %s17, 1
    %p40 = por %p38, %p39
    %p42 = scmp.ne.s32.totalorder %s25, %s41
    %p43 = scmp.eq.s32.totalorder %s17, 0
    %p44 = por %p42, %p43
    %s46 = sadd.s32 %s45, 1
    %p49 = scmp.eq.s32.totalorder %s11, 1
    %p50 = scmp.ne.s32.totalorder %s45, %s47
    %p51 = scmp.eq.s32.totalorder %s11, 0
    %p52 = por %p50, %p51
    %p53 = scmp.ne.s32.totalorder %s45, %s47
    %p54 = scmp.eq.s32.totalorder %s16, 1
    %p55 = por %p53, %p54
    %p56 = scmp.ne.s32.totalorder %s47, %s48
    %p57 = scmp.eq.s32.totalorder %s16, 0
    %p58 = por %p56, %p57
    %p59 = scmp.ne.s32.totalorder %s47, %s48
    %p60 = scmp.eq.s32.totalorder %s17, 1
    %p61 = por %p59, %p60
    %p63 = scmp.ne.s32.totalorder %s48, %s62
    %p64 = scmp.eq.s32.totalorder %s17, 0
    %p65 = por %p63, %p64
    %s67 = sadd.s32 %s66, 1
    %p70 = scmp.eq.s32.totalorder %s11, 1
    %p71 = scmp.ne.s32.totalorder %s66, %s68
    %p72 = scmp.eq.s32.totalorder %s11, 0
    %p73 = por %p71, %p72
    %p74 = scmp.ne.s32.totalorder %s66, %s68
    %p75 = scmp.eq.s32.totalorder %s16, 1
    %p76 = por %p74, %p75
    %p77 = scmp.ne.s32.totalorder %s68, %s69
    %p78 = scmp.eq.s32.totalorder %s16, 0
    %p79 = por %p77, %p78
    %p80 = scmp.ne.s32.totalorder %s68, %s69
    %p81 = scmp.eq.s32.totalorder %s17, 1
    %p82 = por %p80, %p81
    %p84 = scmp.ne.s32.totalorder %s69, %s83
    %p85 = scmp.eq.s32.totalorder %s17, 0
    %p86 = por %p84, %p85
    %s88 = sadd.s32 %s87, 1
    %p91 = scmp.eq.s32.totalorder %s11, 1
    %p92 = scmp.ne.s32.totalorder %s87, %s89
    %p93 = scmp.eq.s32.totalorder %s11, 0
    %p94 = por %p92, %p93
    %p95 = scmp.ne.s32.totalorder %s87, %s89
    %p96 = scmp.eq.s32.totalorder %s16, 1
    %p97 = por %p95, %p96
    %p98 = scmp.ne.s32.totalorder %s89, %s90
    %p99 = scmp.eq.s32.totalorder %s16, 0
    %p100 = por %p98, %p99
    %p101 = scmp.ne.s32.totalorder %s89, %s90
    %p102 = scmp.eq.s32.totalorder %s17, 1
    %p103 = por %p101, %p102
    %p105 = scmp.ne.s32.totalorder %s90, %s104
    %p106 = scmp.eq.s32.totalorder %s17, 0
    %p107 = por %p105, %p106
    %s109 = sadd.s32 %s108, 1
    %p112 = scmp.eq.s32.totalorder %s11, 1
    %p113 = scmp.ne.s32.totalorder %s108, %s110
    %p114 = scmp.eq.s32.totalorder %s11, 0
    %p115 = por %p113, %p114
    %p116 = scmp.ne.s32.totalorder %s108, %s110
    %p117 = scmp.eq.s32.totalorder %s16, 1
    %p118 = por %p116, %p117
    %p119 = scmp.ne.s32.totalorder %s110, %s111
    %p120 = scmp.eq.s32.totalorder %s16, 0
    %p121 = por %p119, %p120
    %p122 = scmp.ne.s32.totalorder %s110, %s111
    %p123 = scmp.eq.s32.totalorder %s17, 1
    %p124 = por %p122, %p123
    %p126 = scmp.ne.s32.totalorder %s111, %s125
    %p127 = scmp.eq.s32.totalorder %s17, 0
    %p128 = por %p126, %p127
    %s129 = ssub.s32 %s11, %s18
    %p130 = scmp.eq.s32.totalorder %s129, 0
    %s132 = sadd.s32 %s131, 1
    %s133 = scalar_select %p130, %s131, %s132
    %p136 = pneg %p130
    %p137 = scmp.eq.s32.totalorder %s11, 1
    %p138 = por %p136, %p137
    %p139 = scmp.ne.s32.totalorder %s131, %s134
    %p140 = scmp.eq.s32.totalorder %s11, 0
    %p141 = por %p139, %p140
    %p142 = scmp.ne.s32.totalorder %s131, %s134
    %p143 = scmp.eq.s32.totalorder %s16, 1
    %p144 = por %p142, %p143
    %p145 = scmp.ne.s32.totalorder %s134, %s135
    %p146 = scmp.eq.s32.totalorder %s16, 0
    %p147 = por %p145, %p146
    %p148 = scmp.ne.s32.totalorder %s134, %s135
    %p149 = scmp.eq.s32.totalorder %s17, 1
    %p150 = por %p148, %p149
    %p152 = scmp.ne.s32.totalorder %s135, %s151
    %p153 = scmp.eq.s32.totalorder %s17, 0
    %p154 = por %p152, %p153
    %p155 = scmp.le.s32.totalorder 1, %s11
    %p156 = scmp.lt.s32.totalorder %s11, 3
    %p157 = pnand %p155, %p156
    %p158 = pneg %p157
    // Predicated region
    $region9: #{tpu_custom_call.1} parent=5 // pred_check
      _
    $region10: #{tpu_custom_call.1} parent=5 // pred_check_branch
      %160 = sbr.rel (%p157) target = $region12
    $region11: #{tpu_custom_call.1} parent=5 // pred_region
      %s161 = ssub.s32 %s11, 1
      // Predicated region
      $region13: #{tpu_custom_call.1} parent=11 // pred_check
        %p162 = pneg %p58
      $region14: #{tpu_custom_call.1} parent=11 // pred_check_branch
        %164 = sbr.rel (%p162) target = $region16
      $region15: #{tpu_custom_call.1} parent=11 // pred_region
        _
      $region16: #{tpu_custom_call.1} parent=11 // pred_fallthru
        _
      // Predicated region
      $region17: #{tpu_custom_call.1} parent=11 // pred_check
        %p165 = pneg %p79
      $region18: #{tpu_custom_call.1} parent=11 // pred_check_branch
        %167 = sbr.rel (%p165) target = $region20
      $region19: #{tpu_custom_call.1} parent=11 // pred_region
        _
      $region20: #{tpu_custom_call.1} parent=11 // pred_fallthru
        _
      // Predicated region
      $region21: #{tpu_custom_call.1} parent=11 // pred_check
        %p168 = pneg %p100
      $region22: #{tpu_custom_call.1} parent=11 // pred_check_branch
        %170 = sbr.rel (%p168) target = $region24
      $region23: #{tpu_custom_call.1} parent=11 // pred_region
        _
      $region24: #{tpu_custom_call.1} parent=11 // pred_fallthru
        _
      // Predicated region
      $region25: #{tpu_custom_call.1} parent=11 // pred_check
        %p171 = pneg %p121
      $region26: #{tpu_custom_call.1} parent=11 // pred_check_branch
        %173 = sbr.rel (%p171) target = $region28
      $region27: #{tpu_custom_call.1} parent=11 // pred_region
        _
      $region28: #{tpu_custom_call.1} parent=11 // pred_fallthru
        _
    $region12: #{tpu_custom_call.1} parent=5 // pred_fallthru
      _
    %p174 = scmp.lt.s32.totalorder %s11, 2
    // Predicated region
    $region29: #{tpu_custom_call.1} parent=5 // pred_check
      %p175 = pneg %p174
    $region30: #{tpu_custom_call.1} parent=5 // pred_check_branch
      %177 = sbr.rel (%p175) target = $region32
    $region31: #{tpu_custom_call.1} parent=5 // pred_region
      // Predicated region
      $region33: #{tpu_custom_call.1} parent=31 // pred_check
        %p178 = pneg %p31
      $region34: #{tpu_custom_call.1} parent=31 // pred_check_branch
        %180 = sbr.rel (%p178) target = $region36
      $region35: #{tpu_custom_call.1} parent=31 // pred_region
        %s181 = smul.u32 4, %s11
        %p182 = scmp.lt.s32.totalorder %s181, 7
        %s183 = scalar_select %p182, %s181, 7
        %s184 = smul.addr %s183, 8
        %s185 = scalar_lea.vmem %s0, %s184
        %s186 = smul.u32 4, %s11
      $region36: #{tpu_custom_call.1} parent=31 // pred_fallthru
        _
    $region32: #{tpu_custom_call.1} parent=5 // pred_fallthru
      _
    %p187 = scmp.le.s32.totalorder 1, %s11
    %p188 = scmp.lt.s32.totalorder %s11, 3
    %p189 = pnand %p187, %p188
    %p190 = pneg %p189
    // Predicated region
    $region37: #{tpu_custom_call.1} parent=5 // pred_check
      _
    $region38: #{tpu_custom_call.1} parent=5 // pred_check_branch
      %192 = sbr.rel (%p189) target = $region40
    $region39: #{tpu_custom_call.1} parent=5 // pred_region
      %s193 = ssub.s32 %s11, 1
      %s194 = smul.u32 4, %s16
      %p195 = scmp.lt.s32.totalorder %s194, 7
      %s196 = scalar_select %p195, %s194, 7
      %s197 = smul.addr %s196, 8
      %s198 = scalar_lea.vmem %s0, %s197
      %p199 = pneg %p37
      %p200 = pneg %p34
      %p201 = pneg %p58
      %p202 = pneg %p55
      %p203 = pneg %p79
      %p204 = pneg %p76
      %p205 = pneg %p100
      %p206 = pneg %p97
      %p207 = pneg %p121
      %p208 = pneg %p118
      %p209 = pneg %p147
      %p210 = pneg %p144
      %s211 = smul.u32 4, %s16
      %p212 = scmp.lt.s32.totalorder %s211, 7
      %s213 = scalar_select %p212, %s211, 7
      %s214 = smul.addr %s213, 8
      %s215 = scalar_lea.vmem %s5, %s214
      %s216 = smul.u32 4, %s16
      %p217 = scmp.lt.s32.totalorder %s216, 7
      %s218 = scalar_select %p217, %s216, 7
      %s219 = smul.addr %s218, 8
      %s220 = scalar_lea.vmem %s0, %s219
      %s221 = smul.u32 4, %s16
      %s222 = smul.u32 4, %s16
      %p223 = scmp.lt.s32.totalorder %s222, 7
      %s224 = scalar_select %p223, %s222, 7
      %s225 = smul.addr %s224, 8
      %s226 = scalar_lea.vmem %s5, %s225
      %s227 = smul.u32 4, %s16
      %v228 = vld [vmem:[%s220] sm:$0xff]
      %v229 = vld [vmem:[%s220 + $0x8] sm:$0xff]
      %v230 = vld [vmem:[%s220 + $0x10] sm:$0xff]
      %v231 = vld [vmem:[%s220 + $0x18] sm:$0xff]
      %v232 = vld [vmem:[%s1] sm:$0xff]
      %v233 = vld [vmem:[%s1 + $0x8] sm:$0xff]
      %v234 = vld [vmem:[%s2] sm:$0x1]
      %v236 = vperm.slane %v234, 0
      %vm238 = vcmask 130048
      %v240 = vsel %vm238, %v228, 0
      %v243 = vsel %vm238, %v229, 0
      %v246 = vsel %vm238, %v230, 0
      %v249 = vsel %vm238, %v231, 0
      %251 = vmatpush.msra.mxu0 0.0
      %252 = vmatpush.msra.mxu0 0.0
      %253 = vmatpush.msra.mxu0 0.0
      %254 = vmatpush.msra.mxu0 0.0
      %255 = vmatpush.msra.mxu0 0.0
      %256 = vmatpush.msra.mxu0 0.0
      %257 = vmatpush.msra.mxu0 0.0
      %258 = vmatpush.msra.mxu0 0.0
      %259 = vmatpush.msra.mxu0 0.0
      %260 = vmatpush.msra.mxu0 0.0
      %261 = vmatpush.msra.mxu0 0.0
      %262 = vmatpush.msra.mxu0 0.0
      %263 = vmatpush.msra.mxu0 0.0
      %264 = vmatpush.msra.mxu0 0.0
      %265 = vmatpush.msra.mxu0 %v233
      %266 = vmatpush.msra.mxu0 %v232
      %267 = vmatmul.f32.gmra.mxu0 %v240
      %v268 = vpop.f32.mrf.mxu0
      %v269 = vadd.f32 %v236, %v268
      %270 = vmatmul.f32.gmra.mxu0 %v243
      %v271 = vpop.f32.mrf.mxu0
      %v272 = vadd.f32 %v236, %v271
      %273 = vmatmul.f32.gmra.mxu0 %v246
      %v274 = vpop.f32.mrf.mxu0
      %v275 = vadd.f32 %v236, %v274
      %276 = vmatmul.f32.gmra.mxu0 %v249
      %v277 = vpop.f32.mrf.mxu0
      %v278 = vadd.f32 %v236, %v277
      %279 = vdwg.mxu0
      %v280 = vmax.f32 %v269, 0.0
      %v281 = vmax.f32 %v272, 0.0
      %v282 = vmax.f32 %v275, 0.0
      %v283 = vmax.f32 %v278, 0.0
      %v284 = vld [vmem:[%s3] sm:$0xff]
      %v285 = vld [vmem:[%s3 + $0x8] sm:$0xff]
      %v286 = vld [vmem:[%s3 + $0x10] sm:$0xff]
      %v287 = vld [vmem:[%s3 + $0x18] sm:$0x3f]
      %v288 = vld [vmem:[%s4] sm:$0x1]
      %v290 = vperm.slane %v288, 0
      %vm292 = vcmask 244736
      %v294 = vsel %vm292, %v280, 0
      %v297 = vsel %vm292, %v281, 0
      %v300 = vsel %vm292, %v282, 0
      %v303 = vsel %vm292, %v283, 0
      %vm305 = vcmask 1045504
      %v307 = vsel %vm305, %v287, 0
      %309 = vmatpush.msra.mxu0 0.0
      %310 = vmatpush.msra.mxu0 0.0
      %311 = vmatpush.msra.mxu0 0.0
      %312 = vmatpush.msra.mxu0 0.0
      %313 = vmatpush.msra.mxu0 0.0
      %314 = vmatpush.msra.mxu0 0.0
      %315 = vmatpush.msra.mxu0 0.0
      %316 = vmatpush.msra.mxu0 0.0
      %317 = vmatpush.msra.mxu0 0.0
      %318 = vmatpush.msra.mxu0 0.0
      %319 = vmatpush.msra.mxu0 0.0
      %320 = vmatpush.msra.mxu0 0.0
      %321 = vmatpush.msra.mxu0 %v307
      %322 = vmatpush.msra.mxu0 %v286
      %323 = vmatpush.msra.mxu0 %v285
      %324 = vmatpush.msra.mxu0 %v284
      %325 = vmatmul.f32.gmra.mxu0 %v294
      %v326 = vpop.f32.mrf.mxu0
      %v327 = vadd.f32 %v290, %v326
      %328 = vmatmul.f32.gmra.mxu0 %v297
      %v329 = vpop.f32.mrf.mxu0
      %v330 = vadd.f32 %v290, %v329
      %331 = vmatmul.f32.gmra.mxu0 %v300
      %v332 = vpop.f32.mrf.mxu0
      %v333 = vadd.f32 %v290, %v332
      %334 = vmatmul.f32.gmra.mxu0 %v303
      %v335 = vpop.f32.mrf.mxu0
      %v336 = vadd.f32 %v290, %v335
      %337 = vdwg.mxu0
      %vm338 = vcmask 31744
      %339 = vst.msk [vmem:[%s226] sm:$0xff] %vm338, %v327
      %340 = vst.msk [vmem:[%s226 + $0x8] sm:$0xff] %vm338, %v330
      %341 = vst.msk [vmem:[%s226 + $0x10] sm:$0xff] %vm338, %v333
      %342 = vst.msk [vmem:[%s226 + $0x18] sm:$0xff] %vm338, %v336
      %s343 = smul.u32 4, %s16
      %p344 = scmp.lt.s32.totalorder %s343, 7
      %s345 = scalar_select %p344, %s343, 7
      %s346 = smul.addr %s345, 8
      %s347 = scalar_lea.vmem %s5, %s346
      // Predicated region
      $region41: #{tpu_custom_call.1} parent=39 // pred_check
        %p348 = pneg %p144
      $region42: #{tpu_custom_call.1} parent=39 // pred_check_branch
        %350 = sbr.rel (%p348) target = $region44
      $region43: #{tpu_custom_call.1} parent=39 // pred_region
        %s351 = smul.u32 4, %s16
      $region44: #{tpu_custom_call.1} parent=39 // pred_fallthru
        _
    $region40: #{tpu_custom_call.1} parent=5 // pred_fallthru
      _
    %p352 = scmp.le.s32.totalorder 2, %s11
    // Predicated region
    $region45: #{tpu_custom_call.1} parent=5 // pred_check
      %p353 = pneg %p352
    $region46: #{tpu_custom_call.1} parent=5 // pred_check_branch
      %355 = sbr.rel (%p353) target = $region48
    $region47: #{tpu_custom_call.1} parent=5 // pred_region
      %s356 = ssub.s32 %s11, 2
      // Predicated region
      $region49: #{tpu_custom_call.1} parent=47 // pred_check
        %p357 = pneg %p150
      $region50: #{tpu_custom_call.1} parent=47 // pred_check_branch
        %359 = sbr.rel (%p357) target = $region52
      $region51: #{tpu_custom_call.1} parent=47 // pred_region
        %s360 = smul.u32 4, %s17
        %p361 = scmp.lt.s32.totalorder %s360, 7
        %s362 = scalar_select %p361, %s360, 7
        %s363 = smul.addr %s362, 8
        %s364 = scalar_lea.vmem %s5, %s363
      $region52: #{tpu_custom_call.1} parent=47 // pred_fallthru
        _
    $region48: #{tpu_custom_call.1} parent=5 // pred_fallthru
      _
  $region6: #{tpu_custom_call.1} parent=0 // loop_footer
    %s15 = sadd.s32 1, %s11
  $region7: #{tpu_custom_call.1} parent=0 // loop_footer_branch
    %10 = sbr.rel target = $region3
  $region8: #{tpu_custom_call.1} parent=0 // loop_exit
    _

</llo_original>
